<compile_context>
chip_gen: v5e
topology: v5e:2x2
jax: 0.10.0
libtpu: 0.0.40
codegen_flags: <defaults>
</compile_context>

<pallas_src>
import functools
import math

import jax
import jax.numpy as jnp
from jax import lax
from jax.experimental import pallas as pl
from jax.experimental.pallas import tpu as pltpu


# ----------------------------------------------------------------------------
# Kernels
# ----------------------------------------------------------------------------
def _ln_last_kernel(x_ref, w_ref, b_ref, o_ref, *, eps, inv_c):
    """Rows (tm, C); reduce over the lane (last) axis. Single-pass variance."""
    x = x_ref[...].astype(jnp.float32)                        # (tm, C)
    mean = jnp.sum(x, axis=-1, keepdims=True) * inv_c
    ex2 = jnp.sum(x * x, axis=-1, keepdims=True) * inv_c
    var = jnp.maximum(ex2 - mean * mean, 0.0)                 # fp32 acc; clamp cancellation
    inv = lax.rsqrt(var + eps)
    o_ref[...] = ((x - mean) * inv * w_ref[...] + b_ref[...]).astype(o_ref.dtype)


def _ln_last_grouped_kernel(x_ref, w_ref, b_ref, pr_ref, pb_ref, o_ref, *, eps, inv_c):
    """Lane-dense small-C path with a factored MXU reduction.

    x : (tm, G) where each lane row packs g original rows of length C (G = g*C).
    pr: (G, 128) ones "segment-reduce" matrix (column j sums group j; j >= g is 0).
    pb: (128, G) ones "broadcast" matrix (row j fans group-j stats back out).
    w/b: (1, G) = weight/bias tiled g times.
    """
    x = x_ref[...].astype(jnp.float32)                        # (tm, G)
    pr = pr_ref[...]                                          # (G, 128)
    pb = pb_ref[...]                                          # (128, G)
    s1 = jnp.dot(x, pr, preferred_element_type=jnp.float32,
                 precision=lax.Precision.HIGH)                # (tm, 128) group sums
    s2 = jnp.dot(x * x, pr, preferred_element_type=jnp.float32,
                 precision=lax.Precision.HIGH)                # (tm, 128) group sum of squares
    mean = s1 * inv_c
    var = jnp.maximum(s2 * inv_c - mean * mean, 0.0)
    inv = lax.rsqrt(var + eps)
    mean_b = jnp.dot(mean, pb, preferred_element_type=jnp.float32,
                     precision=lax.Precision.HIGH)            # (tm, G)
    inv_b = jnp.dot(inv, pb, preferred_element_type=jnp.float32,
                    precision=lax.Precision.HIGH)             # (tm, G)
    o_ref[...] = ((x - mean_b) * inv_b * w_ref[...] + b_ref[...]).astype(o_ref.dtype)


def _ln_first_kernel(x_ref, w_ref, b_ref, o_ref, *, eps, inv_c):
    """Block (C, tl); reduce over the channel (sublane) axis. Single-pass variance."""
    x = x_ref[...].astype(jnp.float32)                        # (C, tl)
    mean = jnp.sum(x, axis=0, keepdims=True) * inv_c          # (1, tl)
    ex2 = jnp.sum(x * x, axis=0, keepdims=True) * inv_c
    var = jnp.maximum(ex2 - mean * mean, 0.0)
    inv = lax.rsqrt(var + eps)
    o_ref[...] = ((x - mean) * inv * w_ref[...] + b_ref[...]).astype(o_ref.dtype)


# ----------------------------------------------------------------------------
# Tiling helpers
# ----------------------------------------------------------------------------
def _round_down(x, m):
    return (x // m) * m


def _round_up(x, m):
    return ((x + m - 1) // m) * m


def _sublane_align(dtype):
    # Min second-to-last tile dim: 8 for 4-byte, 16 for 2-byte, 32 for 1-byte.
    itemsize = jnp.dtype(dtype).itemsize
    return max(8, 32 // itemsize)


@functools.lru_cache(maxsize=1)
def _chip_params():
    """(working-set byte budget, vmem_limit_bytes, min grid steps), generation-aware."""
    cap = None
    try:
        cap = getattr(pltpu.get_tpu_info(), "vmem_capacity_bytes", None)
    except Exception:
        cap = None
    if cap is not None and cap <= 64 * 1024 * 1024:
        # 64-MiB-VMEM / 2-TC parts (v7x-class): smaller working set, >=8 total
        # grid steps so each TensorCore still gets a pipelined stream of blocks,
        # and leave headroom below the 64 MiB physical VMEM.
        return 12 * 1024 * 1024, 48 * 1024 * 1024, 8
    # 128-MiB parts (v5e/v6e) -- and the default when the query fails.
    return 24 * 1024 * 1024, 64 * 1024 * 1024, 2


def _pick_rows(n_rows, row_bytes, budget, align, min_steps):
    """Rows per block: working-set-budget driven, aligned, >= min_steps grid steps."""
    if n_rows <= align:
        return n_rows                       # full dim (always a legal block dim)
    tm = max(1, budget // max(1, row_bytes))
    tm = max(align, _round_down(min(tm, n_rows), align))
    cap = max(align, _round_up(pl.cdiv(n_rows, min_steps), align))
    return min(tm, cap)


def _pick_lanes(L, c_pad, bytes_per_elem, budget, batch, min_steps, itemsize):
    """Lane-tile for the channels_first layout (multiple of 128 or full L)."""
    if L <= 128:
        return L
    col_bytes = c_pad * bytes_per_elem
    tl = _round_down(budget // max(1, col_bytes), 128)
    # Enough total grid steps (B * ceil(L/tl)) for DMA/compute overlap per core.
    steps_l = pl.cdiv(min_steps, max(1, batch))
    if steps_l > 1:
        tl = min(tl, max(128, _round_up(pl.cdiv(L, steps_l), 128)))
    # Keep >= ~2 KiB contiguous per strided row of the (C, tl) block (v5e DMA rate).
    min_burst = _round_up(max(128, 2048 // itemsize), 128)
    tl = max(128, min_burst, tl)
    if tl >= L:
        return L
    return tl


def _group_factor(C):
    """Rows to pack per lane row so the lane axis becomes a multiple of 128."""
    if C % 128 == 0:
        return 1
    g = 128 // math.gcd(C, 128)
    if g * C > 2048:                        # keep packed rows / ones matrices modest
        return 1
    return g


# ----------------------------------------------------------------------------
# pallas_call wrappers
# ----------------------------------------------------------------------------
def _ln_last_plain_call(x2d, w32, b32, eps, C):
    rows = x2d.shape[0]
    budget, vmem_limit, min_steps = _chip_params()
    itemsize = jnp.dtype(x2d.dtype).itemsize
    align = _sublane_align(x2d.dtype)
    # Per-element working set: double-buffered in/out blocks + ~4 fp32 intermediates.
    bytes_per_elem = 4 * itemsize + 16
    row_bytes = _round_up(C, 128) * bytes_per_elem
    tm = _pick_rows(rows, row_bytes, budget, align, min_steps)
    grid = (pl.cdiv(rows, tm),)

    w2d = w32.reshape(1, C)
    b2d = b32.reshape(1, C)
    return pl.pallas_call(
        functools.partial(_ln_last_kernel, eps=eps, inv_c=1.0 / C),
        out_shape=jax.ShapeDtypeStruct((rows, C), x2d.dtype),
        grid_spec=pltpu.PrefetchScalarGridSpec(
            num_scalar_prefetch=0,
            grid=grid,
            in_specs=[
                pl.BlockSpec((tm, C), lambda i: (i, 0)),
                pl.BlockSpec((1, C), lambda i: (0, 0)),
                pl.BlockSpec((1, C), lambda i: (0, 0)),
            ],
            out_specs=pl.BlockSpec((tm, C), lambda i: (i, 0)),
        ),
        compiler_params=pltpu.CompilerParams(
            dimension_semantics=("parallel",),
            vmem_limit_bytes=vmem_limit,
        ),
    )(x2d, w2d, b2d)


def _ln_last_grouped_call(x2d, w32, b32, eps, C, g):
    bulk = x2d.shape[0]                     # multiple of g
    rows = bulk // g
    G = g * C                               # multiple of 128 by construction
    budget, vmem_limit, min_steps = _chip_params()
    itemsize = jnp.dtype(x2d.dtype).itemsize
    align = _sublane_align(x2d.dtype)
    # Grouped kernel keeps ~5-6 fp32 intermediates of the block alive.
    bytes_per_elem = 4 * itemsize + 24
    row_bytes = G * bytes_per_elem
    tm = _pick_rows(rows, row_bytes, budget, align, min_steps)
    grid = (pl.cdiv(rows, tm),)

    xg = x2d.reshape(rows, G)               # free row-major repack
    w2d = jnp.tile(w32, g).reshape(1, G)
    b2d = jnp.tile(b32, g).reshape(1, G)
    # Segment-reduce / broadcast ones matrices, padded to 128 stat lanes.
    seg = jnp.arange(G, dtype=jnp.int32) // C          # group id per packed lane
    grp = jnp.arange(128, dtype=jnp.int32)
    p_reduce = (seg[:, None] == grp[None, :]).astype(jnp.float32)   # (G, 128)
    p_bcast = (grp[:, None] == seg[None, :]).astype(jnp.float32)    # (128, G)

    out = pl.pallas_call(
        functools.partial(_ln_last_grouped_kernel, eps=eps, inv_c=1.0 / C),
        out_shape=jax.ShapeDtypeStruct((rows, G), x2d.dtype),
        grid_spec=pltpu.PrefetchScalarGridSpec(
            num_scalar_prefetch=0,
            grid=grid,
            in_specs=[
                pl.BlockSpec((tm, G), lambda i: (i, 0)),
                pl.BlockSpec((1, G), lambda i: (0, 0)),
                pl.BlockSpec((1, G), lambda i: (0, 0)),
                pl.BlockSpec((G, 128), lambda i: (0, 0)),
                pl.BlockSpec((128, G), lambda i: (0, 0)),
            ],
            out_specs=pl.BlockSpec((tm, G), lambda i: (i, 0)),
        ),
        compiler_params=pltpu.CompilerParams(
            dimension_semantics=("parallel",),
            vmem_limit_bytes=vmem_limit,
        ),
    )(xg, w2d, b2d, p_reduce, p_bcast)
    return out.reshape(bulk, C)


def layer_norm_channels_last(x, weight, bias, eps=1e-6):
    """x: (..., C); weight/bias: (C,). Normalizes over the trailing axis."""
    orig_shape = x.shape
    C = orig_shape[-1]
    N = 1
    for d in orig_shape[:-1]:
        N *= d

    x2d = x.reshape(N, C)
    w32 = weight.astype(jnp.float32)
    b32 = bias.astype(jnp.float32)

    g = _group_factor(C)
    bulk = (N // g) * g if g > 1 else 0
    if bulk > 0:
        parts = [_ln_last_grouped_call(x2d[:bulk], w32, b32, eps, C, g)]
        if bulk < N:
            # Only the <g tail rows take the masked narrow-store plain path.
            parts.append(_ln_last_plain_call(x2d[bulk:], w32, b32, eps, C))
        out2d = parts[0] if len(parts) == 1 else jnp.concatenate(parts, axis=0)
    else:
        out2d = _ln_last_plain_call(x2d, w32, b32, eps, C)
    return out2d.reshape(orig_shape)


def layer_norm_channels_first(x, weight, bias, eps=1e-6):
    """x: (B, C, H, W); weight/bias: (C,). Normalizes over the channel axis."""
    B, C, H, W = x.shape
    L = H * W
    x3d = x.reshape(B, C, L)
    w2d = weight.astype(jnp.float32).reshape(C, 1)
    b2d = bias.astype(jnp.float32).reshape(C, 1)

    budget, vmem_limit, min_steps = _chip_params()
    itemsize = jnp.dtype(x.dtype).itemsize
    c_pad = _round_up(C, _sublane_align(x.dtype))
    bytes_per_elem = 4 * itemsize + 16
    tl = _pick_lanes(L, c_pad, bytes_per_elem, budget, B, min_steps, itemsize)
    grid = (B, pl.cdiv(L, tl))

    out = pl.pallas_call(
        functools.partial(_ln_first_kernel, eps=eps, inv_c=1.0 / C),
        out_shape=jax.ShapeDtypeStruct((B, C, L), x.dtype),
        grid_spec=pltpu.PrefetchScalarGridSpec(
            num_scalar_prefetch=0,
            grid=grid,
            in_specs=[
                pl.BlockSpec((None, C, tl), lambda b, j: (b, 0, j)),  # kernel: (C, tl)
                pl.BlockSpec((C, 1), lambda b, j: (0, 0)),
                pl.BlockSpec((C, 1), lambda b, j: (0, 0)),
            ],
            out_specs=pl.BlockSpec((None, C, tl), lambda b, j: (b, 0, j)),
        ),
        compiler_params=pltpu.CompilerParams(
            dimension_semantics=("parallel", "parallel"),
            vmem_limit_bytes=vmem_limit,
        ),
    )(x3d, w2d, b2d)
    return out.reshape(B, C, H, W)


class LayerNormPallas:
    """Mirror of the PyTorch module: weight=ones, bias=zeros (deterministic init)."""

    def __init__(self, normalized_shape, eps=1e-6, data_format="channels_last"):
        if data_format not in ("channels_last", "channels_first"):
            raise NotImplementedError
        self.weight = jnp.ones((normalized_shape,), jnp.float32)
        self.bias = jnp.zeros((normalized_shape,), jnp.float32)
        self.eps = eps
        self.data_format = data_format

    def __call__(self, x):
        if self.data_format == "channels_last":
            return layer_norm_channels_last(x, self.weight, self.bias, self.eps)
        return layer_norm_channels_first(x, self.weight, self.bias, self.eps)


# ----------------------------------------------------------------------------
# Reference (plain JAX) for sanity-checking
# ----------------------------------------------------------------------------
def _ref_channels_last(x, w, b, eps):
    u = jnp.mean(x, axis=-1, keepdims=True)
    s = jnp.mean((x - u) ** 2, axis=-1, keepdims=True)
    return (x - u) / jnp.sqrt(s + eps) * w + b


def _ref_channels_first(x, w, b, eps):
    u = jnp.mean(x, axis=1, keepdims=True)
    s = jnp.mean((x - u) ** 2, axis=1, keepdims=True)
    xn = (x - u) / jnp.sqrt(s + eps)
    return w[:, None, None] * xn + b[:, None, None]


if __name__ == "__main__":
    key = jax.random.PRNGKey(0)
    k1, k2, k3, k4, k5, k6 = jax.random.split(key, 6)

    B, C, H, W = 2, 4, 16, 16

    # 1) channels_first: NCHW input, normalize over C (sublane reduction).
    x_cf = jax.random.normal(k1, (B, C, H, W), jnp.float32)
    ln_cf = LayerNormPallas(C, eps=1e-6, data_format="channels_first")
    out_cf = ln_cf(x_cf)
    jax.block_until_ready(out_cf)
    ref_cf = _ref_channels_first(x_cf, ln_cf.weight, ln_cf.bias, ln_cf.eps)
    assert out_cf.shape == x_cf.shape
    assert jnp.allclose(out_cf, ref_cf, atol=1e-4, rtol=1e-4)

    # 2) channels_last: NHWC input, small C -> grouped lane-dense path.
    x_cl = jax.random.normal(k2, (B, H, W, C), jnp.float32)
    ln_cl = LayerNormPallas(C, eps=1e-6, data_format="channels_last")
    out_cl = ln_cl(x_cl)
    jax.block_until_ready(out_cl)
    ref_cl = _ref_channels_last(x_cl, ln_cl.weight, ln_cl.bias, ln_cl.eps)
    assert out_cl.shape == x_cl.shape
    assert jnp.allclose(out_cl, ref_cl, atol=1e-4, rtol=1e-4)

    # 3) channels_last with C a multiple of 128 (plain lane-dense path) and a
    #    row count that does not divide the tile (exercises the masked row tail).
    C2 = 128
    x_cl2 = jax.random.normal(k3, (2, 5, 5, C2), jnp.float32)
    w2 = 1.0 + 0.1 * jax.random.normal(k4, (C2,), jnp.float32)
    b2 = jnp.linspace(-1.0, 1.0, C2, dtype=jnp.float32)
    out_cl2 = layer_norm_channels_last(x_cl2, w2, b2, 1e-6)
    jax.block_until_ready(out_cl2)
    ref_cl2 = _ref_channels_last(x_cl2, w2, b2, 1e-6)
    assert jnp.allclose(out_cl2, ref_cl2, atol=1e-4, rtol=1e-4)

    # 4) channels_last with C=96 (g=4, G=384) and N % g != 0:
    #    grouped bulk + plain tail path, plus the true masked-lane fallback kernel.
    C3 = 96
    x_cl3 = jax.random.normal(k5, (2, 3, 5, C3), jnp.float32)     # N = 30, bulk = 28
    w3 = 1.0 + 0.1 * jax.random.normal(k6, (C3,), jnp.float32)
    b3 = jnp.linspace(-0.5, 0.5, C3, dtype=jnp.float32)
    out_cl3 = layer_norm_channels_last(x_cl3, w3, b3, 1e-6)
    jax.block_until_ready(out_cl3)
    ref_cl3 = _ref_channels_last(x_cl3, w3, b3, 1e-6)
    assert jnp.allclose(out_cl3, ref_cl3, atol=1e-4, rtol=1e-4)

    # 5) grouped path with rows % tm != 0 (masked tail block on the grouped kernel).
    x_cl4 = jax.random.normal(k3, (2, 15, 32, C), jnp.float32)    # N = 960, rows = 30
    out_cl4 = layer_norm_channels_last(x_cl4, ln_cl.weight, ln_cl.bias, 1e-6)
    jax.block_until_ready(out_cl4)
    ref_cl4 = _ref_channels_last(x_cl4, ln_cl.weight, ln_cl.bias, 1e-6)
    assert jnp.allclose(out_cl4, ref_cl4, atol=1e-4, rtol=1e-4)

    print("KERNEL_OK")
</pallas_src>

<mosaic_0001>
module attributes {stable_mosaic.version = 11 : i64} {
  func.func @_ln_first_kernel(%arg0: i32, %arg1: i32, %arg2: memref<1x4x256xf32, #tpu.memory_space<vmem>>, %arg3: memref<4x1xf32, #tpu.memory_space<vmem>>, %arg4: memref<4x1xf32, #tpu.memory_space<vmem>>, %arg5: memref<1x4x256xf32, #tpu.memory_space<vmem>>) attributes {dimension_semantics = [#tpu.dimension_semantics<parallel>, #tpu.dimension_semantics<parallel>], iteration_bounds = array<i64: 2, 1>, scalar_prefetch = 0 : i64, scratch_operands = 0 : i64, tpu.core_type = #tpu.core_type<tc>, window_params = [{transform_indices = @transform_0, window_bounds = array<i64: 1, 4, 256>}, {pipeline_mode = #tpu.pipeline_mode<synchronous>, transform_indices = @transform_1, window_bounds = array<i64: 4, 1>}, {pipeline_mode = #tpu.pipeline_mode<synchronous>, transform_indices = @transform_2, window_bounds = array<i64: 4, 1>}, {transform_indices = @transform_3, window_bounds = array<i64: 1, 4, 256>}]} {
    %c0 = arith.constant 0 : index
    %c0_0 = arith.constant 0 : index
    %c0_1 = arith.constant 0 : index
    %0 = vector.load %arg2[%c0, %c0_0, %c0_1] : memref<1x4x256xf32, #tpu.memory_space<vmem>>, vector<1x4x256xf32>
    %1 = vector.shape_cast %0 : vector<1x4x256xf32> to vector<4x256xf32>
    %cst = arith.constant dense<0.000000e+00> : vector<256xf32>
    %2 = vector.multi_reduction <add>, %1, %cst [0] : vector<4x256xf32> to vector<256xf32>
    %3 = vector.shape_cast %2 : vector<256xf32> to vector<1x256xf32>
    %cst_2 = arith.constant 2.500000e-01 : f32
    %4 = vector.broadcast %cst_2 : f32 to vector<1x256xf32>
    %5 = arith.mulf %3, %4 : vector<1x256xf32>
    %6 = arith.mulf %1, %1 : vector<4x256xf32>
    %cst_3 = arith.constant dense<0.000000e+00> : vector<256xf32>
    %7 = vector.multi_reduction <add>, %6, %cst_3 [0] : vector<4x256xf32> to vector<256xf32>
    %8 = vector.shape_cast %7 : vector<256xf32> to vector<1x256xf32>
    %cst_4 = arith.constant 2.500000e-01 : f32
    %9 = vector.broadcast %cst_4 : f32 to vector<1x256xf32>
    %10 = arith.mulf %8, %9 : vector<1x256xf32>
    %11 = arith.mulf %5, %5 : vector<1x256xf32>
    %12 = arith.subf %10, %11 : vector<1x256xf32>
    %cst_5 = arith.constant 0.000000e+00 : f32
    %13 = vector.broadcast %cst_5 : f32 to vector<1x256xf32>
    %14 = arith.maximumf %12, %13 : vector<1x256xf32>
    %cst_6 = arith.constant 9.99999997E-7 : f32
    %15 = vector.broadcast %cst_6 : f32 to vector<1x256xf32>
    %16 = arith.addf %14, %15 : vector<1x256xf32>
    %17 = math.rsqrt %16 : vector<1x256xf32>
    %18 = vector.broadcast %5 : vector<1x256xf32> to vector<4x256xf32>
    %19 = arith.subf %1, %18 : vector<4x256xf32>
    %20 = vector.broadcast %17 : vector<1x256xf32> to vector<4x256xf32>
    %21 = arith.mulf %19, %20 : vector<4x256xf32>
    %c0_7 = arith.constant 0 : index
    %c0_8 = arith.constant 0 : index
    %22 = vector.load %arg3[%c0_7, %c0_8] : memref<4x1xf32, #tpu.memory_space<vmem>>, vector<4x1xf32>
    %23 = vector.broadcast %22 : vector<4x1xf32> to vector<4x256xf32>
    %24 = arith.mulf %21, %23 : vector<4x256xf32>
    %c0_9 = arith.constant 0 : index
    %c0_10 = arith.constant 0 : index
    %25 = vector.load %arg4[%c0_9, %c0_10] : memref<4x1xf32, #tpu.memory_space<vmem>>, vector<4x1xf32>
    %26 = vector.broadcast %25 : vector<4x1xf32> to vector<4x256xf32>
    %27 = arith.addf %24, %26 : vector<4x256xf32>
    %c0_11 = arith.constant 0 : index
    %c0_12 = arith.constant 0 : index
    %c0_13 = arith.constant 0 : index
    %28 = vector.load %arg5[%c0_11, %c0_12, %c0_13] : memref<1x4x256xf32, #tpu.memory_space<vmem>>, vector<1x4x256xf32>
    %29 = vector.shape_cast %28 : vector<1x4x256xf32> to vector<4x256xf32>
    %30 = vector.shape_cast %27 : vector<4x256xf32> to vector<1x4x256xf32>
    tpu.vector_store %arg5[%c0_11, %c0_12, %c0_13], %30 {strides = array<i32>} : memref<1x4x256xf32, #tpu.memory_space<vmem>>, vector<1x4x256xf32>,
    return
  }
  func.func @transform_0(%arg0: i32, %arg1: i32) -> (i32, i32, i32) {
    %c0_i32 = arith.constant 0 : i32
    %c0_i32_0 = arith.constant 0 : i32
    return %arg0, %c0_i32, %arg1 : i32, i32, i32
  }
  func.func @transform_1(%arg0: i32, %arg1: i32) -> (i32, i32) {
    %c0_i32 = arith.constant 0 : i32
    %c0_i32_0 = arith.constant 0 : i32
    %c0_i32_1 = arith.constant 0 : i32
    return %c0_i32, %c0_i32_0 : i32, i32
  }
  func.func @transform_2(%arg0: i32, %arg1: i32) -> (i32, i32) {
    %c0_i32 = arith.constant 0 : i32
    %c0_i32_0 = arith.constant 0 : i32
    %c0_i32_1 = arith.constant 0 : i32
    return %c0_i32, %c0_i32_0 : i32, i32
  }
  func.func @transform_3(%arg0: i32, %arg1: i32) -> (i32, i32, i32) {
    %c0_i32 = arith.constant 0 : i32
    %c0_i32_0 = arith.constant 0 : i32
    return %arg0, %c0_i32, %arg1 : i32, i32, i32
  }
}

</mosaic_0001>

<llo_original>
// kernel: tpu_custom_call.1
$region0: #{tpu_custom_call.1}
  #allocation0 [shape = 'u32[]', space=smem, size = 0x4, offset = 0x4, fixed_abs, tag = 'smem constant byte address 0x4 - core index']
  #allocation1 [shape = 'u32[72,128]{1,0:T(1,128)}', space=vmem, size = 0x9000, scoped, tag = 'internal scratch']
  %s0 = inlined_call_operand.hbm [shape: f32[2,4,256], index: 0, kind: input, shape index: {}]
  %s1 = inlined_call_operand.vmem [shape: f32[4,1], index: 1, kind: input, shape index: {}]
  %s2 = inlined_call_operand.vmem [shape: f32[4,1], index: 2, kind: input, shape index: {}]
  %s3 = inlined_call_operand.hbm [shape: f32[2,4,256], index: 3, kind: output, shape index: {}]
  %s4 = sld [smem:[#allocation0]]
  $region49: #{tpu_custom_call.1} parent=0
    _
  %s6 = ssub.s32 1, %s4
  %s7 = scalar_select 0, %s6, %s4
  $region1: #{tpu_custom_call.1} parent=0
    #allocation2 [shape = 'u8[8192]{0}', space=vmem, size = 0x2000, scoped, tag = 'input window, operand 0']
    #allocation3 [shape = 's32[2]{0}', space=sflag, size = 0x8, scoped, tag = 'scoped memory for tpu_custom_call.1']
    #allocation4 [shape = 's32[2]{0}', space=sflag, size = 0x8, scoped, tag = 'scoped memory for tpu_custom_call.1']
    #allocation5 [shape = 'u8[8192]{0}', space=vmem, size = 0x2000, scoped, tag = 'output window, operand 0']
    %8 = vsyncpa [#allocation3], 0
    %s9 = scalar_lea.sflag [#allocation3], 1
    %10 = vsyncpa %s9, 0
    %11 = vsyncpa [#allocation4], 0
    %s12 = scalar_lea.sflag [#allocation4], 1
    %13 = vsyncpa %s12, 0
    loop: start=0, step=1, limit=4
    $region2: #{tpu_custom_call.1} parent=1 // loop_pre_header
      _
    $region3: #{tpu_custom_call.1} parent=1 // loop_header
      %s15 = sphi 0, %s19
      %p16 = scmp.ge.s32.totalorder %s15, 4
      %s22 = sphi 0, %s34
      %s23 = sphi 0, %s30
      %s24 = sphi 0, %s22
      %s25 = sphi 0, %s23
      %s26 = sphi 0, %s24
      %s27 = sphi 0, %s25
      %s39 = sphi 0, %s41
      %s42 = sphi 0, %s39
      %s43 = sphi 0, %s42
      %s59 = sphi 0, %s43
      %s63 = sphi 0, %s63
      %s65 = sphi 0, %s63
      %s66 = sphi 0, %s65
      %s80 = sphi 0, %s66
      %s84 = sphi 0, %s84
      %s86 = sphi 0, %s84
      %s87 = sphi 0, %s86
      %s101 = sphi 0, %s87
      %s109 = sphi 0, %s111
      %s112 = sphi 0, %s109
      %s113 = sphi 0, %s112
      %s129 = sphi 0, %s113
    $region4: #{tpu_custom_call.1} parent=1 // loop_header_branch
      %18 = sbr.rel (%p16) target = $region8
    $region5: #{tpu_custom_call.1} parent=1 // loop_body
      %s20 = ssub.s32 %s15, 1
      %s21 = ssub.s32 %s15, 2
      %s28 = sadd.s32 1, %s23
      %p29 = scmp.ge.s32.totalorder %s28, 1
      %s30 = scalar_select %p29, 0, %s28
      %s31 = sadd.s32 1, %s22
      %s32 = scalar_select %p29, %s31, %s22
      %p33 = scmp.ge.s32.totalorder %s32, 2
      %s34 = scalar_select %p33, 0, %s32
      %s35 = ssub.s32 %s22, %s34
      %s36 = ssub.s32 %s23, %s30
      %s37 = sor.u32 %s35, %s36
      %p38 = scmp.eq.s32.totalorder %s37, 0
      %s40 = sadd.s32 %s39, 1
      %s41 = scalar_select %p38, %s39, %s40
      %p44 = pneg %p38
      %p45 = scmp.eq.s32.totalorder %s15, 1
      %p46 = por %p44, %p45
      %p47 = scmp.ne.s32.totalorder %s39, %s42
      %p48 = scmp.eq.s32.totalorder %s15, 0
      %p49 = por %p47, %p48
      %p50 = scmp.ne.s32.totalorder %s39, %s42
      %p51 = scmp.eq.s32.totalorder %s20, 1
      %p52 = por %p50, %p51
      %p53 = scmp.ne.s32.totalorder %s42, %s43
      %p54 = scmp.eq.s32.totalorder %s20, 0
      %p55 = por %p53, %p54
      %p56 = scmp.ne.s32.totalorder %s42, %s43
      %p57 = scmp.eq.s32.totalorder %s21, 1
      %p58 = por %p56, %p57
      %p60 = scmp.ne.s32.totalorder %s43, %s59
      %p61 = scmp.eq.s32.totalorder %s21, 0
      %p62 = por %p60, %p61
      %s64 = sadd.s32 %s63, 1
      %p67 = scmp.eq.s32.totalorder %s15, 1
      %p68 = scmp.ne.s32.totalorder %s63, %s65
      %p69 = scmp.eq.s32.totalorder %s15, 0
      %p70 = por %p68, %p69
      %p71 = scmp.ne.s32.totalorder %s63, %s65
      %p72 = scmp.eq.s32.totalorder %s20, 1
      %p73 = por %p71, %p72
      %p74 = scmp.ne.s32.totalorder %s65, %s66
      %p75 = scmp.eq.s32.totalorder %s20, 0
      %p76 = por %p74, %p75
      %p77 = scmp.ne.s32.totalorder %s65, %s66
      %p78 = scmp.eq.s32.totalorder %s21, 1
      %p79 = por %p77, %p78
      %p81 = scmp.ne.s32.totalorder %s66, %s80
      %p82 = scmp.eq.s32.totalorder %s21, 0
      %p83 = por %p81, %p82
      %s85 = sadd.s32 %s84, 1
      %p88 = scmp.eq.s32.totalorder %s15, 1
      %p89 = scmp.ne.s32.totalorder %s84, %s86
      %p90 = scmp.eq.s32.totalorder %s15, 0
      %p91 = por %p89, %p90
      %p92 = scmp.ne.s32.totalorder %s84, %s86
      %p93 = scmp.eq.s32.totalorder %s20, 1
      %p94 = por %p92, %p93
      %p95 = scmp.ne.s32.totalorder %s86, %s87
      %p96 = scmp.eq.s32.totalorder %s20, 0
      %p97 = por %p95, %p96
      %p98 = scmp.ne.s32.totalorder %s86, %s87
      %p99 = scmp.eq.s32.totalorder %s21, 1
      %p100 = por %p98, %p99
      %p102 = scmp.ne.s32.totalorder %s87, %s101
      %p103 = scmp.eq.s32.totalorder %s21, 0
      %p104 = por %p102, %p103
      %s105 = ssub.s32 %s22, %s34
      %s106 = ssub.s32 %s23, %s30
      %s107 = sor.u32 %s105, %s106
      %p108 = scmp.eq.s32.totalorder %s107, 0
      %s110 = sadd.s32 %s109, 1
      %s111 = scalar_select %p108, %s109, %s110
      %p114 = pneg %p108
      %p115 = scmp.eq.s32.totalorder %s15, 1
      %p116 = por %p114, %p115
      %p117 = scmp.ne.s32.totalorder %s109, %s112
      %p118 = scmp.eq.s32.totalorder %s15, 0
      %p119 = por %p117, %p118
      %p120 = scmp.ne.s32.totalorder %s109, %s112
      %p121 = scmp.eq.s32.totalorder %s20, 1
      %p122 = por %p120, %p121
      %p123 = scmp.ne.s32.totalorder %s112, %s113
      %p124 = scmp.eq.s32.totalorder %s20, 0
      %p125 = por %p123, %p124
      %p126 = scmp.ne.s32.totalorder %s112, %s113
      %p127 = scmp.eq.s32.totalorder %s21, 1
      %p128 = por %p126, %p127
      %p130 = scmp.ne.s32.totalorder %s113, %s129
      %p131 = scmp.eq.s32.totalorder %s21, 0
      %p132 = por %p130, %p131
      %p133 = scmp.le.s32.totalorder 1, %s15
      %p134 = scmp.lt.s32.totalorder %s15, 3
      %p135 = pnand %p133, %p134
      %p136 = pneg %p135
      // Predicated region
      $region9: #{tpu_custom_call.1} parent=5 // pred_check
        _
      $region10: #{tpu_custom_call.1} parent=5 // pred_check_branch
        %138 = sbr.rel (%p135) target = $region12
      $region11: #{tpu_custom_call.1} parent=5 // pred_region
        %s139 = ssub.s32 %s15, 1
        // Predicated region
        $region13: #{tpu_custom_call.1} parent=11 // pred_check
          %p140 = pneg %p76
        $region14: #{tpu_custom_call.1} parent=11 // pred_check_branch
          %142 = sbr.rel (%p140) target = $region16
        $region15: #{tpu_custom_call.1} parent=11 // pred_region
          _
        $region16: #{tpu_custom_call.1} parent=11 // pred_fallthru
          _
        // Predicated region
        $region17: #{tpu_custom_call.1} parent=11 // pred_check
          %p143 = pneg %p97
        $region18: #{tpu_custom_call.1} parent=11 // pred_check_branch
          %145 = sbr.rel (%p143) target = $region20
        $region19: #{tpu_custom_call.1} parent=11 // pred_region
          _
        $region20: #{tpu_custom_call.1} parent=11 // pred_fallthru
          _
      $region12: #{tpu_custom_call.1} parent=5 // pred_fallthru
        _
      %p146 = scmp.lt.s32.totalorder %s15, 2
      // Predicated region
      $region21: #{tpu_custom_call.1} parent=5 // pred_check
        %p147 = pneg %p146
      $region22: #{tpu_custom_call.1} parent=5 // pred_check_branch
        %149 = sbr.rel (%p147) target = $region24
      $region23: #{tpu_custom_call.1} parent=5 // pred_region
        // Predicated region
        $region25: #{tpu_custom_call.1} parent=23 // pred_check
          %p150 = pneg %p49
        $region26: #{tpu_custom_call.1} parent=23 // pred_check_branch
          %152 = sbr.rel (%p150) target = $region28
        $region27: #{tpu_custom_call.1} parent=23 // pred_region
          %s153 = sand.u32 %s39, 1
          %s154 = scalar_lea.sflag [#allocation3], %s153
          %s155 = sand.u32 %s39, 1
          %s156 = smul.addr %s155, 8
          %s157 = scalar_lea.vmem [#allocation2], %s156
          %s158 = smul.u32 2, %s23
          %160 = vsyncadd %s154, 0
          %s161 = smul.addr %s22, 2
          %s162 = sadd.s32 %s158, %s161
          %s163 = smul.addr %s162, 4
          %s164 = scalar_lea.hbm %s0, %s163
          %s166 = sshll.u32 %s164, 4
          %s167 = int_to_ptr.hbm [resolvable:$true] %s166
          %s168 = sshll.u32 %s157, 4
          %s169 = int_to_ptr.vmem [resolvable:$true] %s168
          %171 = dma.hbm_to_vmem [thread:$0]  %s167, 128, %s169, %s154
        $region28: #{tpu_custom_call.1} parent=23 // pred_fallthru
          _
      $region24: #{tpu_custom_call.1} parent=5 // pred_fallthru
        _
      %p172 = scmp.le.s32.totalorder 1, %s15
      %p173 = scmp.lt.s32.totalorder %s15, 3
      %p174 = pnand %p172, %p173
      %p175 = pneg %p174
      // Predicated region
      $region29: #{tpu_custom_call.1} parent=5 // pred_check
        _
      $region30: #{tpu_custom_call.1} parent=5 // pred_check_branch
        %177 = sbr.rel (%p174) target = $region32
      $region31: #{tpu_custom_call.1} parent=5 // pred_region
        %s178 = ssub.s32 %s15, 1
        %s179 = sand.u32 %s42, 1
        %s180 = scalar_lea.sflag [#allocation3], %s179
        %s181 = sand.u32 %s42, 1
        %s182 = smul.addr %s181, 8
        %s183 = scalar_lea.vmem [#allocation2], %s182
        // Predicated region
        $region33: #{tpu_custom_call.1} parent=31 // pred_check
          %p184 = pneg %p55
        $region34: #{tpu_custom_call.1} parent=31 // pred_check_branch
          %186 = sbr.rel (%p184) target = $region36
        $region35: #{tpu_custom_call.1} parent=31 // pred_region
          %188 = dma.done %s180, 128
        $region36: #{tpu_custom_call.1} parent=31 // pred_fallthru
          _
        %s189 = sand.u32 %s42, 1
        %s190 = scalar_lea.sflag [#allocation3], %s189
        %s191 = sand.u32 %s42, 1
        %s192 = smul.addr %s191, 8
        %s193 = scalar_lea.vmem [#allocation2], %s192
        %p194 = pneg %p55
        %p195 = pneg %p52
        %p196 = pneg %p76
        %p197 = pneg %p73
        %p198 = pneg %p97
        %p199 = pneg %p94
        %p200 = pneg %p125
        %p201 = pneg %p122
        %s202 = sand.u32 %s112, 1
        %s203 = scalar_lea.sflag [#allocation4], %s202
        %s204 = sand.u32 %s112, 1
        %s205 = smul.addr %s204, 8
        %s206 = scalar_lea.vmem [#allocation5], %s205
        %s207 = smul.u32 2, %s25
        %s208 = smul.u32 2, %s25
        %v209 = vld [vmem:[%s183] sm:$0xff]
        %211 = vst [vmem:[#allocation1] ss:$2 sm:$0xff] %v209
        %v212 = vld.sshfl [vmem:[#allocation1] sm:$0xff pattern:$0x75316420]
        %v213 = vld.sshfl [vmem:[#allocation1 + $0x8] sm:$0xff pattern:$0x75316420]
        %vm216 = vcmask 1043456
        %v217 = vsel %vm216, %v212, 0.0
        %v218 = vrot.slane %v217, 4
        %v219 = vadd.f32 %v217, %v218
        %v220 = vrot.slane %v219, 2
        %v221 = vadd.f32 %v219, %v220
        %v222 = vrot.slane %v221, 1
        %v223 = vadd.f32 %v221, %v222
        %v224 = vsel %vm216, %v213, 0.0
        %v225 = vrot.slane %v224, 4
        %v226 = vadd.f32 %v224, %v225
        %v227 = vrot.slane %v226, 2
        %v228 = vadd.f32 %v226, %v227
        %v229 = vrot.slane %v228, 1
        %v230 = vadd.f32 %v228, %v229
        %v231 = vmul.f32 %v223, 0.25
        %v232 = vmul.f32 %v230, 0.25
        %v233 = vmul.f32 %v209, %v209
        %235 = vst [vmem:[#allocation1] ss:$2 sm:$0xff] %v233
        %v236 = vld.sshfl [vmem:[#allocation1] sm:$0xff pattern:$0x75316420]
        %v237 = vld.sshfl [vmem:[#allocation1 + $0x8] sm:$0xff pattern:$0x75316420]
        %v240 = vsel %vm216, %v236, 0.0
        %v241 = vrot.slane %v240, 4
        %v242 = vadd.f32 %v240, %v241
        %v243 = vrot.slane %v242, 2
        %v244 = vadd.f32 %v242, %v243
        %v245 = vrot.slane %v244, 1
        %v246 = vadd.f32 %v244, %v245
        %v247 = vsel %vm216, %v237, 0.0
        %v248 = vrot.slane %v247, 4
        %v249 = vadd.f32 %v247, %v248
        %v250 = vrot.slane %v249, 2
        %v251 = vadd.f32 %v249, %v250
        %v252 = vrot.slane %v251, 1
        %v253 = vadd.f32 %v251, %v252
        %v254 = vmul.f32 %v246, 0.25
        %v255 = vmul.f32 %v253, 0.25
        %v256 = vmul.f32 %v231, %v231
        %v257 = vmul.f32 %v232, %v232
        %v258 = vsub.f32 %v254, %v256
        %v259 = vsub.f32 %v255, %v257
        %v260 = vmax.f32 %v258, 0.0
        %v261 = vmax.f32 %v259, 0.0
        %v262 = vadd.f32 %v260, 1e-06
        %v263 = vadd.f32 %v261, 1e-06
        %v264 = vrsqrt.pop %v262
        %v265 = vmul.f32 %v264, %v262
        %v266 = vmul.f32 %v265, %v264
        %v267 = vmul.f32 0.5, %v266
        %v268 = vsub.f32 1.5, %v267
        %v269 = vmul.f32 %v264, %v268
        %vm270 = vweird.f32 %v262
        %vm271 = vweird.f32 %v264
        %vm272 = vmor %vm270, %vm271
        %v273 = vsel %vm272, %v264, %v269
        %v274 = vrsqrt.pop %v263
        %v275 = vmul.f32 %v274, %v263
        %v276 = vmul.f32 %v275, %v274
        %v277 = vmul.f32 0.5, %v276
        %v278 = vsub.f32 1.5, %v277
        %v279 = vmul.f32 %v274, %v278
        %vm280 = vweird.f32 %v263
        %vm281 = vweird.f32 %v274
        %vm282 = vmor %vm280, %vm281
        %v283 = vsel %vm282, %v274, %v279
        %v286 = vrot.slane %v232, 4
        %v287 = vsel %vm216, %v231, %v286
        %v289 = vsub.f32 %v209, %v287
        %v292 = vrot.slane %v283, 4
        %v293 = vsel %vm216, %v273, %v292
        %v295 = vmul.f32 %v289, %v293
        %v296 = vld [vmem:[%s1] sm:$0xf]
        %298 = vset.pattern.permute.xlu0 0
        %299 = vperm.xlu0 %298, %v296
        %v300 = vpop.permute.xlu0 %299
        %v302 = vunpack.c.l.s4 839922192
        %v303 = vunpack.c.0.s8 %v302
        %v304 = vperm.slane %v300, %v303
        %v306 = vmul.f32 %v295, %v304
        %v307 = vld [vmem:[%s2] sm:$0xf]
        %309 = vset.pattern.permute.xlu0 0
        %310 = vperm.xlu0 %309, %v307
        %v311 = vpop.permute.xlu0 %310
        %v313 = vunpack.c.l.s4 839922192
        %v314 = vunpack.c.0.s8 %v313
        %v315 = vperm.slane %v311, %v314
        %v317 = vadd.f32 %v306, %v315
        %318 = vst [vmem:[%s206] sm:$0xff] %v317
        %s319 = sand.u32 %s112, 1
        %s320 = scalar_lea.sflag [#allocation4], %s319
        %s321 = sand.u32 %s112, 1
        %s322 = smul.addr %s321, 8
        %s323 = scalar_lea.vmem [#allocation5], %s322
        // Predicated region
        $region37: #{tpu_custom_call.1} parent=31 // pred_check
          %p324 = pneg %p122
        $region38: #{tpu_custom_call.1} parent=31 // pred_check_branch
          %326 = sbr.rel (%p324) target = $region40
        $region39: #{tpu_custom_call.1} parent=31 // pred_region
          %s327 = smul.u32 2, %s25
          %329 = vsyncadd %s320, 0
          %s330 = smul.addr %s24, 2
          %s331 = sadd.s32 %s327, %s330
          %s332 = smul.addr %s331, 4
          %s333 = scalar_lea.hbm %s3, %s332
          %s335 = sshll.u32 %s323, 4
          %s336 = int_to_ptr.vmem [resolvable:$true] %s335
          %s337 = sshll.u32 %s333, 4
          %s338 = int_to_ptr.hbm [resolvable:$true] %s337
          %340 = dma.vmem_to_hbm [thread:$0]  %s336, 128, %s338, %s320
        $region40: #{tpu_custom_call.1} parent=31 // pred_fallthru
          _
      $region32: #{tpu_custom_call.1} parent=5 // pred_fallthru
        _
      %p341 = scmp.le.s32.totalorder 2, %s15
      // Predicated region
      $region41: #{tpu_custom_call.1} parent=5 // pred_check
        %p342 = pneg %p341
      $region42: #{tpu_custom_call.1} parent=5 // pred_check_branch
        %344 = sbr.rel (%p342) target = $region44
      $region43: #{tpu_custom_call.1} parent=5 // pred_region
        %s345 = ssub.s32 %s15, 2
        // Predicated region
        $region45: #{tpu_custom_call.1} parent=43 // pred_check
          %p346 = pneg %p128
        $region46: #{tpu_custom_call.1} parent=43 // pred_check_branch
          %348 = sbr.rel (%p346) target = $region48
        $region47: #{tpu_custom_call.1} parent=43 // pred_region
          %s349 = sand.u32 %s113, 1
          %s350 = scalar_lea.sflag [#allocation4], %s349
          %s351 = sand.u32 %s113, 1
          %s352 = smul.addr %s351, 8
          %s353 = scalar_lea.vmem [#allocation5], %s352
          %355 = dma.done %s350, 128
        $region48: #{tpu_custom_call.1} parent=43 // pred_fallthru
          _
      $region44: #{tpu_custom_call.1} parent=5 // pred_fallthru
        _
    $region6: #{tpu_custom_call.1} parent=1 // loop_footer
      %s19 = sadd.s32 1, %s15
    $region7: #{tpu_custom_call.1} parent=1 // loop_footer_branch
      %14 = sbr.rel target = $region3
    $region8: #{tpu_custom_call.1} parent=1 // loop_exit
      _
    %356 = vsyncpa [#allocation3], 1
    %s357 = scalar_lea.sflag [#allocation3], 1
    %358 = vsyncpa %s357, 1
    %359 = vsyncpa [#allocation4], 1
    %s360 = scalar_lea.sflag [#allocation4], 1
    %361 = vsyncpa %s360, 1

</llo_original>
